<compile_context>
chip_gen: v7x
topology: tpu7x:2x2x1
jax: 0.10.0
libtpu: 0.0.40
codegen_flags: <defaults>
</compile_context>

<pallas_src>
import math

import jax
import jax.numpy as jnp
from jax.experimental import pallas as pl
from jax.experimental.pallas import tpu as pltpu


def _round_up(x, m):
    return (x + m - 1) // m * m


# -----------------------------------------------------------------------------
# Kernel: one GRU layer over the full sequence (single grid step).
# -----------------------------------------------------------------------------
def _gru_layer_kernel(x_ref, w_ih_ref, w_hh_ref, b_ih_ref, b_hh_ref,
                      out_ref, h_last_ref, gi_ref):
    """x_ref:      (S, Bp, Inp)   f32   time-major, batch/feature zero-padded
       w_ih_ref:   (Inp, 3*Hp)    bf16  gate blocks [r | z | n], each Hp wide
       w_hh_ref:   (Hp, 3*Hp)     bf16
       b_ih_ref:   (1, 3*Hp)      f32
       b_hh_ref:   (1, 3*Hp)      f32
       out_ref:    (S, Bp, Hp)    f32   per-timestep hidden
       h_last_ref: (Bp, Hp)       f32   final hidden
       gi_ref:     (S, Bp, 3*Hp)  f32   scratch: hoisted input projection
    """
    S, Bp, Inp = x_ref.shape
    Hp = w_hh_ref.shape[0]

    # ---- Hoisted input projection: one big MXU GEMM for all timesteps. ----
    # (S, Bp, Inp) -> (S*Bp, Inp) is a sublane-tile-aligned merge (Bp % 8 == 0).
    x_all = x_ref[...].reshape(S * Bp, Inp).astype(jnp.bfloat16)
    gi_all = jnp.dot(x_all, w_ih_ref[...],
                     preferred_element_type=jnp.float32) + b_ih_ref[...]
    gi_ref[...] = gi_all.reshape(S, Bp, 3 * Hp)

    # Recurrent operands hoisted out of the time loop.
    w_hh = w_hh_ref[...]
    b_hh = b_hh_ref[...]

    def step(t, h_prev):
        gi = gi_ref[t]                                        # (Bp, 3Hp) f32
        gh = jnp.dot(h_prev.astype(jnp.bfloat16), w_hh,
                     preferred_element_type=jnp.float32) + b_hh
        # 128-aligned gate slices (each gate block is Hp wide).
        i_r, i_z, i_n = gi[:, :Hp], gi[:, Hp:2 * Hp], gi[:, 2 * Hp:]
        h_r, h_z, h_n = gh[:, :Hp], gh[:, Hp:2 * Hp], gh[:, 2 * Hp:]
        r = jax.nn.sigmoid(i_r + h_r)
        z = jax.nn.sigmoid(i_z + h_z)
        n = jnp.tanh(i_n + r * h_n)
        h_new = (1.0 - z) * n + z * h_prev
        out_ref[t] = h_new                                    # lane-dense store
        return h_new

    h0 = jnp.zeros((Bp, Hp), jnp.float32)                     # zero init hidden
    h_final = jax.lax.fori_loop(0, S, step, h0)
    h_last_ref[...] = h_final


def gru_layer(x_tm, w_ih, w_hh, b_ih, b_hh):
    """x_tm: (S, Bp, Inp) f32 (padded); weights bf16 / biases f32 (padded).
       Returns (out: (S, Bp, Hp) f32, h_last: (Bp, Hp) f32)."""
    S, Bp, Inp = x_tm.shape
    Hp = w_hh.shape[0]

    grid_spec = pltpu.PrefetchScalarGridSpec(
        num_scalar_prefetch=0,
        grid=(1,),                                  # time loop is in-kernel
        in_specs=[
            pl.BlockSpec((S, Bp, Inp), lambda i: (0, 0, 0)),   # x (full seq)
            pl.BlockSpec((Inp, 3 * Hp), lambda i: (0, 0)),     # w_ih
            pl.BlockSpec((Hp, 3 * Hp), lambda i: (0, 0)),      # w_hh
            pl.BlockSpec((1, 3 * Hp), lambda i: (0, 0)),       # b_ih
            pl.BlockSpec((1, 3 * Hp), lambda i: (0, 0)),       # b_hh
        ],
        out_specs=[
            pl.BlockSpec((S, Bp, Hp), lambda i: (0, 0, 0)),    # per-step hidden
            pl.BlockSpec((Bp, Hp), lambda i: (0, 0)),          # final hidden
        ],
        scratch_shapes=[pltpu.VMEM((S, Bp, 3 * Hp), jnp.float32)],
    )

    out_tm, h_last = pl.pallas_call(
        _gru_layer_kernel,
        out_shape=(
            jax.ShapeDtypeStruct((S, Bp, Hp), jnp.float32),
            jax.ShapeDtypeStruct((Bp, Hp), jnp.float32),
        ),
        grid_spec=grid_spec,
        compiler_params=pltpu.CompilerParams(
            dimension_semantics=("arbitrary",),
        ),
    )(x_tm, w_ih, w_hh, b_ih, b_hh)
    return out_tm, h_last


# -----------------------------------------------------------------------------
# Padding helpers: place each H-wide gate block into its own Hp-wide slot.
# -----------------------------------------------------------------------------
def _pad_gru_weight(w, in_pad, h, h_pad):
    # w: (in_dim, 3*h), gate order [r, z, n] -> (in_pad, 3*h_pad)
    in_dim = w.shape[0]
    blocks = []
    for g in range(3):
        blk = w[:, g * h:(g + 1) * h]
        blocks.append(jnp.pad(blk, ((0, in_pad - in_dim), (0, h_pad - h))))
    return jnp.concatenate(blocks, axis=1)


def _pad_gru_bias(b, h, h_pad):
    # b: (1, 3*h) -> (1, 3*h_pad)
    blocks = []
    for g in range(3):
        blk = b[:, g * h:(g + 1) * h]
        blocks.append(jnp.pad(blk, ((0, 0), (0, h_pad - h))))
    return jnp.concatenate(blocks, axis=1)


# -----------------------------------------------------------------------------
# SpeakerRNN.forward equivalent.
# -----------------------------------------------------------------------------
def speaker_rnn_forward(sequence, params):
    """sequence: (batch, seq, emb) f32 (batch_first, like the PyTorch module)
       params:   list of (w_ih:(In,3H), w_hh:(H,3H), b_ih:(1,3H), b_hh:(1,3H))
       returns:  (output: (batch, seq, H), hidden: (num_layers, batch, H))"""
    B, S, E = sequence.shape
    H = params[0][1].shape[0]
    Hp = _round_up(H, 128)
    Bp = _round_up(B, 8)
    Ep = _round_up(E, 128)

    # time-major + zero-pad batch (sublanes) and features (lanes)
    x = jnp.transpose(sequence, (1, 0, 2))                    # (S, B, E)
    x = jnp.pad(x, ((0, 0), (0, Bp - B), (0, Ep - E)))        # (S, Bp, Ep)

    # TODO(synk): fuse all layers into a single pallas_call (stacked weights)
    # to keep inter-layer activations in VMEM; kept per-layer for clarity.
    h_finals = []
    layer_in = x
    for layer, (w_ih, w_hh, b_ih, b_hh) in enumerate(params):
        in_pad = Ep if layer == 0 else Hp
        w_ih_p = _pad_gru_weight(w_ih, in_pad, H, Hp).astype(jnp.bfloat16)
        w_hh_p = _pad_gru_weight(w_hh, Hp, H, Hp).astype(jnp.bfloat16)
        b_ih_p = _pad_gru_bias(b_ih, H, Hp)
        b_hh_p = _pad_gru_bias(b_hh, H, Hp)
        layer_out, h_last = gru_layer(layer_in, w_ih_p, w_hh_p, b_ih_p, b_hh_p)
        h_finals.append(h_last[:B, :H])
        layer_in = layer_out                                  # (S, Bp, Hp)

    output = jnp.transpose(layer_in[:, :B, :H], (1, 0, 2))    # (B, S, H)
    hidden = jnp.stack(h_finals, axis=0)                      # (L, B, H)
    return output, hidden


# -----------------------------------------------------------------------------
# Pure-JAX f32 reference (for a sanity check) and parameter init.
# -----------------------------------------------------------------------------
def gru_reference(sequence, params):
    x = jnp.transpose(sequence, (1, 0, 2))
    B = x.shape[1]
    h_finals = []
    layer_in = x
    for (w_ih, w_hh, b_ih, b_hh) in params:
        H = w_hh.shape[0]

        def cell(h, x_t, w_ih=w_ih, w_hh=w_hh, b_ih=b_ih, b_hh=b_hh):
            gi = x_t @ w_ih + b_ih
            gh = h @ w_hh + b_hh
            i_r, i_z, i_n = jnp.split(gi, 3, axis=-1)
            h_r, h_z, h_n = jnp.split(gh, 3, axis=-1)
            r = jax.nn.sigmoid(i_r + h_r)
            z = jax.nn.sigmoid(i_z + h_z)
            n = jnp.tanh(i_n + r * h_n)
            h_new = (1.0 - z) * n + z * h
            return h_new, h_new

        h0 = jnp.zeros((B, H), jnp.float32)
        h_last, outs = jax.lax.scan(cell, h0, layer_in)
        h_finals.append(h_last)
        layer_in = outs
    return jnp.transpose(layer_in, (1, 0, 2)), jnp.stack(h_finals, axis=0)


def init_gru_params(key, emb_size, hidden_size, num_layers):
    """PyTorch-equivalent GRU params, stored pre-transposed as (In, 3H)."""
    k = 1.0 / math.sqrt(hidden_size)
    params = []
    for layer in range(num_layers):
        in_size = emb_size if layer == 0 else hidden_size
        key, k1, k2, k3, k4 = jax.random.split(key, 5)
        w_ih = jax.random.uniform(k1, (in_size, 3 * hidden_size),
                                  jnp.float32, -k, k)
        w_hh = jax.random.uniform(k2, (hidden_size, 3 * hidden_size),
                                  jnp.float32, -k, k)
        b_ih = jax.random.uniform(k3, (1, 3 * hidden_size),
                                  jnp.float32, -k, k)
        b_hh = jax.random.uniform(k4, (1, 3 * hidden_size),
                                  jnp.float32, -k, k)
        params.append((w_ih, w_hh, b_ih, b_hh))
    return params


if __name__ == "__main__":
    batch_size = 2
    seq_len = 8
    emb_size = 16
    hidden_size = 32
    num_layers = 2

    key = jax.random.PRNGKey(0)
    key, xkey, pkey = jax.random.split(key, 3)

    sequence = jax.random.normal(xkey, (batch_size, seq_len, emb_size),
                                 dtype=jnp.float32)
    params = init_gru_params(pkey, emb_size, hidden_size, num_layers)

    output, hidden = speaker_rnn_forward(sequence, params)
    jax.block_until_ready((output, hidden))

    assert output.shape == (batch_size, seq_len, hidden_size)
    assert hidden.shape == (num_layers, batch_size, hidden_size)

    # Loose check vs. a pure-f32 reference (kernel matmuls use bf16 operands).
    ref_out, ref_hid = gru_reference(sequence, params)
    assert jnp.max(jnp.abs(output - ref_out)) < 5e-2
    assert jnp.max(jnp.abs(hidden - ref_hid)) < 5e-2

    print("KERNEL_OK")
</pallas_src>

<mosaic_0001>
module attributes {stable_mosaic.version = 11 : i64} {
  func.func @_gru_layer_kernel(%arg0: i32, %arg1: memref<8x8x128xf32, #tpu.memory_space<vmem>>, %arg2: memref<128x384xbf16, #tpu.memory_space<vmem>>, %arg3: memref<128x384xbf16, #tpu.memory_space<vmem>>, %arg4: memref<1x384xf32, #tpu.memory_space<vmem>>, %arg5: memref<1x384xf32, #tpu.memory_space<vmem>>, %arg6: memref<8x8x128xf32, #tpu.memory_space<vmem>>, %arg7: memref<8x128xf32, #tpu.memory_space<vmem>>, %arg8: memref<8x8x384xf32, #tpu.memory_space<vmem>>) attributes {dimension_semantics = [#tpu.dimension_semantics<arbitrary>], iteration_bounds = array<i64: 1>, scalar_prefetch = 0 : i64, scratch_operands = 1 : i64, tpu.core_type = #tpu.core_type<tc>, window_params = [{pipeline_mode = #tpu.pipeline_mode<synchronous>, transform_indices = @transform_0, window_bounds = array<i64: 8, 8, 128>}, {pipeline_mode = #tpu.pipeline_mode<synchronous>, transform_indices = @transform_1, window_bounds = array<i64: 128, 384>}, {pipeline_mode = #tpu.pipeline_mode<synchronous>, transform_indices = @transform_2, window_bounds = array<i64: 128, 384>}, {pipeline_mode = #tpu.pipeline_mode<synchronous>, transform_indices = @transform_3, window_bounds = array<i64: 1, 384>}, {pipeline_mode = #tpu.pipeline_mode<synchronous>, transform_indices = @transform_4, window_bounds = array<i64: 1, 384>}, {pipeline_mode = #tpu.pipeline_mode<synchronous>, transform_indices = @transform_5, window_bounds = array<i64: 8, 8, 128>}, {pipeline_mode = #tpu.pipeline_mode<synchronous>, transform_indices = @transform_6, window_bounds = array<i64: 8, 128>}]} {
    %c0 = arith.constant 0 : index
    %c0_0 = arith.constant 0 : index
    %c0_1 = arith.constant 0 : index
    %0 = vector.load %arg1[%c0, %c0_0, %c0_1] : memref<8x8x128xf32, #tpu.memory_space<vmem>>, vector<8x8x128xf32>
    %1 = vector.shape_cast %0 : vector<8x8x128xf32> to vector<64x128xf32>
    %2 = arith.truncf %1 : vector<64x128xf32> to vector<64x128xbf16>
    %c0_2 = arith.constant 0 : index
    %c0_3 = arith.constant 0 : index
    %3 = vector.load %arg2[%c0_2, %c0_3] : memref<128x384xbf16, #tpu.memory_space<vmem>>, vector<128x384xbf16>
    %cst = arith.constant dense<0.000000e+00> : vector<64x384xf32>
    %4 = tpu.matmul %2, %3, %cst {dimension_numbers = #tpu.dot_dimension_numbers<[1], [0], [0], [1], [0, 0, 1, 1], [], []>} : vector<64x128xbf16>, vector<128x384xbf16>, vector<64x384xf32> -> vector<64x384xf32>
    %c0_4 = arith.constant 0 : index
    %c0_5 = arith.constant 0 : index
    %5 = vector.load %arg4[%c0_4, %c0_5] : memref<1x384xf32, #tpu.memory_space<vmem>>, vector<1x384xf32>
    %6 = vector.broadcast %5 : vector<1x384xf32> to vector<64x384xf32>
    %7 = arith.addf %4, %6 : vector<64x384xf32>
    %8 = vector.shape_cast %7 : vector<64x384xf32> to vector<8x8x384xf32>
    %c0_6 = arith.constant 0 : index
    %c0_7 = arith.constant 0 : index
    %c0_8 = arith.constant 0 : index
    %9 = vector.load %arg8[%c0_6, %c0_7, %c0_8] : memref<8x8x384xf32, #tpu.memory_space<vmem>>, vector<8x8x384xf32>
    tpu.vector_store %arg8[%c0_6, %c0_7, %c0_8], %8 {strides = array<i32>} : memref<8x8x384xf32, #tpu.memory_space<vmem>>, vector<8x8x384xf32>,
    %c0_9 = arith.constant 0 : index
    %c0_10 = arith.constant 0 : index
    %10 = vector.load %arg3[%c0_9, %c0_10] : memref<128x384xbf16, #tpu.memory_space<vmem>>, vector<128x384xbf16>
    %c0_11 = arith.constant 0 : index
    %c0_12 = arith.constant 0 : index
    %11 = vector.load %arg5[%c0_11, %c0_12] : memref<1x384xf32, #tpu.memory_space<vmem>>, vector<1x384xf32>
    %cst_13 = arith.constant 0.000000e+00 : f32
    %12 = vector.broadcast %cst_13 : f32 to vector<8x128xf32>
    %c0_i32 = arith.constant 0 : i32
    %c8_i32 = arith.constant 8 : i32
    %13 = arith.addi %c0_i32, %c8_i32 : i32
    %c1_i32 = arith.constant 1 : i32
    %14 = scf.for %arg9 = %c0_i32 to %13 step %c1_i32 iter_args(%arg10 = %12) -> (vector<8x128xf32>)  : i32 {
      %16 = arith.index_cast %arg9 : i32 to index
      %c0_17 = arith.constant 0 : index
      %c0_18 = arith.constant 0 : index
      %17 = vector.load %arg8[%16, %c0_17, %c0_18] : memref<8x8x384xf32, #tpu.memory_space<vmem>>, vector<1x8x384xf32>
      %18 = vector.shape_cast %17 : vector<1x8x384xf32> to vector<8x384xf32>
      %19 = arith.truncf %arg10 : vector<8x128xf32> to vector<8x128xbf16>
      %cst_19 = arith.constant dense<0.000000e+00> : vector<8x384xf32>
      %20 = tpu.matmul %19, %10, %cst_19 {dimension_numbers = #tpu.dot_dimension_numbers<[1], [0], [0], [1], [0, 0, 1, 1], [], []>} : vector<8x128xbf16>, vector<128x384xbf16>, vector<8x384xf32> -> vector<8x384xf32>
      %21 = vector.broadcast %11 : vector<1x384xf32> to vector<8x384xf32>
      %22 = arith.addf %20, %21 : vector<8x384xf32>
      %23 = vector.extract_strided_slice %18 {offsets = [0, 0], sizes = [8, 128], strides = [1, 1]} : vector<8x384xf32> to vector<8x128xf32>
      %24 = vector.extract_strided_slice %18 {offsets = [0, 128], sizes = [8, 128], strides = [1, 1]} : vector<8x384xf32> to vector<8x128xf32>
      %25 = vector.extract_strided_slice %18 {offsets = [0, 256], sizes = [8, 128], strides = [1, 1]} : vector<8x384xf32> to vector<8x128xf32>
      %26 = vector.extract_strided_slice %22 {offsets = [0, 0], sizes = [8, 128], strides = [1, 1]} : vector<8x384xf32> to vector<8x128xf32>
      %27 = vector.extract_strided_slice %22 {offsets = [0, 128], sizes = [8, 128], strides = [1, 1]} : vector<8x384xf32> to vector<8x128xf32>
      %28 = vector.extract_strided_slice %22 {offsets = [0, 256], sizes = [8, 128], strides = [1, 1]} : vector<8x384xf32> to vector<8x128xf32>
      %29 = arith.addf %23, %26 : vector<8x128xf32>
      %30 = arith.negf %29 : vector<8x128xf32>
      %31 = math.exp %30 : vector<8x128xf32>
      %cst_20 = arith.constant 1.000000e+00 : f32
      %32 = vector.broadcast %cst_20 : f32 to vector<8x128xf32>
      %33 = arith.addf %32, %31 : vector<8x128xf32>
      %34 = arith.divf %32, %33 : vector<8x128xf32>
      %35 = arith.addf %24, %27 : vector<8x128xf32>
      %36 = arith.negf %35 : vector<8x128xf32>
      %37 = math.exp %36 : vector<8x128xf32>
      %cst_21 = arith.constant 1.000000e+00 : f32
      %38 = vector.broadcast %cst_21 : f32 to vector<8x128xf32>
      %39 = arith.addf %38, %37 : vector<8x128xf32>
      %40 = arith.divf %38, %39 : vector<8x128xf32>
      %41 = arith.mulf %34, %28 : vector<8x128xf32>
      %42 = arith.addf %25, %41 : vector<8x128xf32>
      %43 = math.tanh %42 : vector<8x128xf32>
      %cst_22 = arith.constant 1.000000e+00 : f32
      %44 = vector.broadcast %cst_22 : f32 to vector<8x128xf32>
      %45 = arith.subf %44, %40 : vector<8x128xf32>
      %46 = arith.mulf %45, %43 : vector<8x128xf32>
      %47 = arith.mulf %40, %arg10 : vector<8x128xf32>
      %48 = arith.addf %46, %47 : vector<8x128xf32>
      %49 = arith.index_cast %arg9 : i32 to index
      %c0_23 = arith.constant 0 : index
      %c0_24 = arith.constant 0 : index
      %50 = vector.load %arg6[%49, %c0_23, %c0_24] : memref<8x8x128xf32, #tpu.memory_space<vmem>>, vector<1x8x128xf32>
      %51 = vector.shape_cast %50 : vector<1x8x128xf32> to vector<8x128xf32>
      %52 = vector.shape_cast %48 : vector<8x128xf32> to vector<1x8x128xf32>
      tpu.vector_store %arg6[%49, %c0_23, %c0_24], %52 {strides = array<i32>} : memref<8x8x128xf32, #tpu.memory_space<vmem>>, vector<1x8x128xf32>,
      scf.yield %48 : vector<8x128xf32>
    }
    %c8_i32_14 = arith.constant 8 : i32
    %c0_15 = arith.constant 0 : index
    %c0_16 = arith.constant 0 : index
    %15 = vector.load %arg7[%c0_15, %c0_16] : memref<8x128xf32, #tpu.memory_space<vmem>>, vector<8x128xf32>
    tpu.vector_store %arg7[%c0_15, %c0_16], %14 {strides = array<i32>} : memref<8x128xf32, #tpu.memory_space<vmem>>, vector<8x128xf32>,
    return
  }
  func.func @transform_0(%arg0: i32) -> (i32, i32, i32) {
    %c0_i32 = arith.constant 0 : i32
    %c0_i32_0 = arith.constant 0 : i32
    %c0_i32_1 = arith.constant 0 : i32
    %c0_i32_2 = arith.constant 0 : i32
    return %c0_i32, %c0_i32_0, %c0_i32_1 : i32, i32, i32
  }
  func.func @transform_1(%arg0: i32) -> (i32, i32) {
    %c0_i32 = arith.constant 0 : i32
    %c0_i32_0 = arith.constant 0 : i32
    %c0_i32_1 = arith.constant 0 : i32
    return %c0_i32, %c0_i32_0 : i32, i32
  }
  func.func @transform_2(%arg0: i32) -> (i32, i32) {
    %c0_i32 = arith.constant 0 : i32
    %c0_i32_0 = arith.constant 0 : i32
    %c0_i32_1 = arith.constant 0 : i32
    return %c0_i32, %c0_i32_0 : i32, i32
  }
  func.func @transform_3(%arg0: i32) -> (i32, i32) {
    %c0_i32 = arith.constant 0 : i32
    %c0_i32_0 = arith.constant 0 : i32
    %c0_i32_1 = arith.constant 0 : i32
    return %c0_i32, %c0_i32_0 : i32, i32
  }
  func.func @transform_4(%arg0: i32) -> (i32, i32) {
    %c0_i32 = arith.constant 0 : i32
    %c0_i32_0 = arith.constant 0 : i32
    %c0_i32_1 = arith.constant 0 : i32
    return %c0_i32, %c0_i32_0 : i32, i32
  }
  func.func @transform_5(%arg0: i32) -> (i32, i32, i32) {
    %c0_i32 = arith.constant 0 : i32
    %c0_i32_0 = arith.constant 0 : i32
    %c0_i32_1 = arith.constant 0 : i32
    %c0_i32_2 = arith.constant 0 : i32
    return %c0_i32, %c0_i32_0, %c0_i32_1 : i32, i32, i32
  }
  func.func @transform_6(%arg0: i32) -> (i32, i32) {
    %c0_i32 = arith.constant 0 : i32
    %c0_i32_0 = arith.constant 0 : i32
    %c0_i32_1 = arith.constant 0 : i32
    return %c0_i32, %c0_i32_0 : i32, i32
  }
}

</mosaic_0001>

<llo_original>
// kernel: tpu_custom_call.1
$region0: #{tpu_custom_call.1}
  #allocation0 [shape = 'u32[]', space=smem, size = 0x4, offset = 0x4, fixed_abs, tag = 'smem constant byte address 0x4 - core index']
  #allocation1 [shape = 'u32[144,128]{1,0:T(1,128)}', space=vmem, size = 0x12000, scoped, tag = 'internal scratch']
  #allocation2 [shape = 'f32[8,8,384]{2,1,0:T(8,128)}', space=vmem, size = 0x18000, scoped, tag = 'scratch operand']
  %s0 = inlined_call_operand.hbm [shape: f32[8,8,128], index: 0, kind: input, shape index: {}]
  %s1 = inlined_call_operand.hbm [shape: bf16[128,384], index: 1, kind: input, shape index: {}]
  %s2 = inlined_call_operand.hbm [shape: bf16[128,384], index: 2, kind: input, shape index: {}]
  %s3 = inlined_call_operand.vmem [shape: f32[1,384], index: 3, kind: input, shape index: {}]
  %s4 = inlined_call_operand.vmem [shape: f32[1,384], index: 4, kind: input, shape index: {}]
  %s5 = inlined_call_operand.hbm [shape: f32[8,8,128], index: 5, kind: output, shape index: {0}]
  %s6 = inlined_call_operand.hbm [shape: f32[8,128], index: 6, kind: output, shape index: {1}]
  %7 = xla_tuple %s5, %s6
  %s8 = sld [smem:[#allocation0]]
  $region57: #{tpu_custom_call.1} parent=0
    _
  %s10 = ssub.s32 1, %s8
  %s11 = scalar_select 0, %s10, %s8
  $region1: #{tpu_custom_call.1} parent=0
    #allocation3 [shape = 'u8[32768]{0}', space=vmem, size = 0x8000, scoped, tag = 'input window, operand 0, single buffered']
    #allocation4 [shape = 's32[1]{0}', space=sflag, size = 0x4, scoped, tag = 'scoped memory for tpu_custom_call.1']
    #allocation5 [shape = 's32[1]{0}', space=sflag, size = 0x4, scoped, tag = 'scoped memory for tpu_custom_call.1']
    #allocation6 [shape = 'u8[98304]{0}', space=vmem, size = 0x18000, scoped, tag = 'input window, operand 1, single buffered']
    #allocation7 [shape = 's32[1]{0}', space=sflag, size = 0x4, scoped, tag = 'scoped memory for tpu_custom_call.1']
    #allocation8 [shape = 'u8[98304]{0}', space=vmem, size = 0x18000, scoped, tag = 'input window, operand 2, single buffered']
    #allocation9 [shape = 'u8[32768]{0}', space=vmem, size = 0x8000, scoped, tag = 'output window, operand 0, single buffered']
    #allocation10 [shape = 'u8[4096]{0}', space=vmem, size = 0x1000, scoped, tag = 'output window, operand 1, single buffered']
    #allocation11 [shape = 's32[1]{0}', space=sflag, size = 0x4, scoped, tag = 'scoped memory for tpu_custom_call.1']
    %12 = vsyncpa [#allocation4], 0
    %13 = vsyncpa [#allocation7], 0
    %14 = vsyncpa [#allocation5], 0
    %15 = vsyncpa [#allocation11], 0
    // Predicated region
    $region2: #{tpu_custom_call.1} parent=1 // pred_check
      _
    $region3: #{tpu_custom_call.1} parent=1 // pred_check_branch
      %17 = sbr.rel (0) target = $region5
    $region4: #{tpu_custom_call.1} parent=1 // pred_region
      %s19 = ssub.s32 1024, 1024
      %20 = vsyncadd [#allocation4], %s19
      %s21 = sshll.u32 [#allocation3], 4
      %s22 = int_to_ptr.vmem [resolvable:$true] %s21
      %27 = dma.hbm_to_vmem [thread:$0]  %s0, 1024, %s22, [#allocation4], 128, 128, 8
    $region5: #{tpu_custom_call.1} parent=1 // pred_fallthru
      _
    // Predicated region
    $region6: #{tpu_custom_call.1} parent=1 // pred_check
      _
    $region7: #{tpu_custom_call.1} parent=1 // pred_check_branch
      %29 = sbr.rel (0) target = $region9
    $region8: #{tpu_custom_call.1} parent=1 // pred_region
      %s31 = ssub.s32 3072, 3072
      %32 = vsyncadd [#allocation7], %s31
      %s33 = sshll.u32 [#allocation6], 4
      %s34 = int_to_ptr.vmem [resolvable:$true] %s33
      %39 = dma.hbm_to_vmem [thread:$0]  %s1, 3072, %s34, [#allocation7], 192, 192, 12
    $region9: #{tpu_custom_call.1} parent=1 // pred_fallthru
      _
    // Predicated region
    $region10: #{tpu_custom_call.1} parent=1 // pred_check
      _
    $region11: #{tpu_custom_call.1} parent=1 // pred_check_branch
      %41 = sbr.rel (0) target = $region13
    $region12: #{tpu_custom_call.1} parent=1 // pred_region
      %s43 = ssub.s32 3072, 3072
      %44 = vsyncadd [#allocation7], %s43
      %s45 = sshll.u32 [#allocation8], 4
      %s46 = int_to_ptr.vmem [resolvable:$true] %s45
      %51 = dma.hbm_to_vmem [thread:$0]  %s2, 3072, %s46, [#allocation7], 192, 192, 12
    $region13: #{tpu_custom_call.1} parent=1 // pred_fallthru
      _
    // Predicated region
    $region14: #{tpu_custom_call.1} parent=1 // pred_check
      _
    $region15: #{tpu_custom_call.1} parent=1 // pred_check_branch
      %53 = sbr.rel (0) target = $region17
    $region16: #{tpu_custom_call.1} parent=1 // pred_region
      _
    $region17: #{tpu_custom_call.1} parent=1 // pred_fallthru
      _
    // Predicated region
    $region18: #{tpu_custom_call.1} parent=1 // pred_check
      _
    $region19: #{tpu_custom_call.1} parent=1 // pred_check_branch
      %55 = sbr.rel (0) target = $region21
    $region20: #{tpu_custom_call.1} parent=1 // pred_region
      _
    $region21: #{tpu_custom_call.1} parent=1 // pred_fallthru
      _
    // Predicated region
    $region22: #{tpu_custom_call.1} parent=1 // pred_check
      _
    $region23: #{tpu_custom_call.1} parent=1 // pred_check_branch
      %57 = sbr.rel (0) target = $region25
    $region24: #{tpu_custom_call.1} parent=1 // pred_region
      %58 = dma.done [#allocation4], 1024
    $region25: #{tpu_custom_call.1} parent=1 // pred_fallthru
      _
    // Predicated region
    $region26: #{tpu_custom_call.1} parent=1 // pred_check
      _
    $region27: #{tpu_custom_call.1} parent=1 // pred_check_branch
      %60 = sbr.rel (0) target = $region29
    $region28: #{tpu_custom_call.1} parent=1 // pred_region
      %61 = dma.done [#allocation7], 3072
    $region29: #{tpu_custom_call.1} parent=1 // pred_fallthru
      _
    // Predicated region
    $region30: #{tpu_custom_call.1} parent=1 // pred_check
      _
    $region31: #{tpu_custom_call.1} parent=1 // pred_check_branch
      %63 = sbr.rel (0) target = $region33
    $region32: #{tpu_custom_call.1} parent=1 // pred_region
      %64 = dma.done [#allocation7], 3072
    $region33: #{tpu_custom_call.1} parent=1 // pred_fallthru
      _
    %v66 = vld [vmem:[#allocation3] sm:$0xff]
    %v67 = vld [vmem:[#allocation3 + $0x8] sm:$0xff]
    %v68 = vld [vmem:[#allocation3 + $0x10] sm:$0xff]
    %v69 = vld [vmem:[#allocation3 + $0x18] sm:$0xff]
    %v70 = vld [vmem:[#allocation3 + $0x20] sm:$0xff]
    %v71 = vld [vmem:[#allocation3 + $0x28] sm:$0xff]
    %v72 = vld [vmem:[#allocation3 + $0x30] sm:$0xff]
    %v73 = vld [vmem:[#allocation3 + $0x38] sm:$0xff]
    %v74 = vpack.c.bf16 %v67, %v66
    %v75 = vpack.c.bf16 %v69, %v68
    %v76 = vpack.c.bf16 %v71, %v70
    %v77 = vpack.c.bf16 %v73, %v72
    %v78 = vld [vmem:[#allocation6] sm:$0xff]
    %v79 = vld [vmem:[#allocation6 + $0x8] sm:$0xf]
    %v80 = vld [vmem:[#allocation6 + $0xc] sm:$0xff]
    %v81 = vld [vmem:[#allocation6 + $0x14] sm:$0xf]
    %v82 = vld [vmem:[#allocation6 + $0x18] sm:$0xff]
    %v83 = vld [vmem:[#allocation6 + $0x20] sm:$0xf]
    %v84 = vld [vmem:[#allocation6 + $0x24] sm:$0xff]
    %v85 = vld [vmem:[#allocation6 + $0x2c] sm:$0xf]
    %v86 = vld [vmem:[#allocation6 + $0x30] sm:$0xff]
    %v87 = vld [vmem:[#allocation6 + $0x38] sm:$0xf]
    %v88 = vld [vmem:[#allocation6 + $0x3c] sm:$0xff]
    %v89 = vld [vmem:[#allocation6 + $0x44] sm:$0xf]
    %v90 = vld [vmem:[#allocation6 + $0x48] sm:$0xff]
    %v91 = vld [vmem:[#allocation6 + $0x50] sm:$0xf]
    %v92 = vld [vmem:[#allocation6 + $0x54] sm:$0xff]
    %v93 = vld [vmem:[#allocation6 + $0x5c] sm:$0xf]
    %v94 = vld [vmem:[#allocation6 + $0x60] sm:$0xff]
    %v95 = vld [vmem:[#allocation6 + $0x68] sm:$0xf]
    %v96 = vld [vmem:[#allocation6 + $0x6c] sm:$0xff]
    %v97 = vld [vmem:[#allocation6 + $0x74] sm:$0xf]
    %v98 = vld [vmem:[#allocation6 + $0x78] sm:$0xff]
    %v99 = vld [vmem:[#allocation6 + $0x80] sm:$0xf]
    %v100 = vld [vmem:[#allocation6 + $0x84] sm:$0xff]
    %v101 = vld [vmem:[#allocation6 + $0x8c] sm:$0xf]
    %v102 = vld [vmem:[#allocation6 + $0x90] sm:$0xff]
    %v103 = vld [vmem:[#allocation6 + $0x98] sm:$0xf]
    %v104 = vld [vmem:[#allocation6 + $0x9c] sm:$0xff]
    %v105 = vld [vmem:[#allocation6 + $0xa4] sm:$0xf]
    %v106 = vld [vmem:[#allocation6 + $0xa8] sm:$0xff]
    %v107 = vld [vmem:[#allocation6 + $0xb0] sm:$0xf]
    %v108 = vld [vmem:[#allocation6 + $0xb4] sm:$0xff]
    %v109 = vld [vmem:[#allocation6 + $0xbc] sm:$0xf]
    %v110 = vld [vmem:[%s3] sm:$0x7]
    %v112 = vlaneseq
    %v113 = vshrl.u32 %v112, 7
    %v114 = vsub.s32 0, %v113
    %v115 = vrot.slane %v110, %v114
    %v116 = vlaneseq
    %v117 = vshrl.u32 %v116, 7
    %v118 = vsub.s32 1, %v117
    %v119 = vrot.slane %v110, %v118
    %v120 = vlaneseq
    %v121 = vshrl.u32 %v120, 7
    %v122 = vsub.s32 2, %v121
    %v123 = vrot.slane %v110, %v122
    %v159 = vunpack.c.l.b16 %v78
    %v160 = vunpack.c.h.b16 %v78
    %v161 = vunpack.c.l.b16 %v79
    %v162 = vunpack.c.l.b16 %v80
    %v163 = vunpack.c.h.b16 %v80
    %v164 = vunpack.c.l.b16 %v81
    %v165 = vunpack.c.l.b16 %v82
    %v166 = vunpack.c.h.b16 %v82
    %v167 = vunpack.c.l.b16 %v83
    %v168 = vunpack.c.l.b16 %v84
    %v169 = vunpack.c.h.b16 %v84
    %v170 = vunpack.c.l.b16 %v85
    %v171 = vunpack.c.l.b16 %v86
    %v172 = vunpack.c.h.b16 %v86
    %v173 = vunpack.c.l.b16 %v87
    %v174 = vunpack.c.l.b16 %v88
    %v175 = vunpack.c.h.b16 %v88
    %v176 = vunpack.c.l.b16 %v89
    %v177 = vunpack.c.l.b16 %v90
    %v178 = vunpack.c.h.b16 %v90
    %v179 = vunpack.c.l.b16 %v91
    %v180 = vunpack.c.l.b16 %v92
    %v181 = vunpack.c.h.b16 %v92
    %v182 = vunpack.c.l.b16 %v93
    %v183 = vunpack.c.l.b16 %v94
    %v184 = vunpack.c.h.b16 %v94
    %v185 = vunpack.c.l.b16 %v95
    %v186 = vunpack.c.l.b16 %v96
    %v187 = vunpack.c.h.b16 %v96
    %v188 = vunpack.c.l.b16 %v97
    %v189 = vunpack.c.l.b16 %v98
    %v190 = vunpack.c.h.b16 %v98
    %v191 = vunpack.c.l.b16 %v99
    %v192 = vunpack.c.l.b16 %v100
    %v193 = vunpack.c.h.b16 %v100
    %v194 = vunpack.c.l.b16 %v101
    %v195 = vunpack.c.l.b16 %v102
    %v196 = vunpack.c.h.b16 %v102
    %v197 = vunpack.c.l.b16 %v103
    %v198 = vunpack.c.l.b16 %v104
    %v199 = vunpack.c.h.b16 %v104
    %v200 = vunpack.c.l.b16 %v105
    %v201 = vunpack.c.l.b16 %v106
    %v202 = vunpack.c.h.b16 %v106
    %v203 = vunpack.c.l.b16 %v107
    %v204 = vunpack.c.l.b16 %v108
    %v205 = vunpack.c.h.b16 %v108
    %v206 = vunpack.c.l.b16 %v109
    %v207 = vpack.c.b16 %v162, %v159
    %v208 = vpack.c.b16 %v163, %v160
    %v209 = vpack.c.b16 %v164, %v161
    %v210 = vpack.c.b16 %v168, %v165
    %v211 = vpack.c.b16 %v169, %v166
    %v212 = vpack.c.b16 %v170, %v167
    %v213 = vpack.c.b16 %v174, %v171
    %v214 = vpack.c.b16 %v175, %v172
    %v215 = vpack.c.b16 %v176, %v173
    %v216 = vpack.c.b16 %v180, %v177
    %v217 = vpack.c.b16 %v181, %v178
    %v218 = vpack.c.b16 %v182, %v179
    %v219 = vpack.c.b16 %v186, %v183
    %v220 = vpack.c.b16 %v187, %v184
    %v221 = vpack.c.b16 %v188, %v185
    %v222 = vpack.c.b16 %v192, %v189
    %v223 = vpack.c.b16 %v193, %v190
    %v224 = vpack.c.b16 %v194, %v191
    %v225 = vpack.c.b16 %v198, %v195
    %v226 = vpack.c.b16 %v199, %v196
    %v227 = vpack.c.b16 %v200, %v197
    %v228 = vpack.c.b16 %v204, %v201
    %v229 = vpack.c.b16 %v205, %v202
    %v230 = vpack.c.b16 %v206, %v203
    %255 = vmatprep.subr.bf16.mxu0 %v208
    %256 = vmatpush1.bf16.msra.mxu0 %v207
    %257 = vmatprep.subr.bf16.mxu0 %v211
    %258 = vmatpush1.bf16.msra.mxu0 %v210
    %259 = vmatprep.subr.bf16.mxu0 %v214
    %260 = vmatpush1.bf16.msra.mxu0 %v213
    %261 = vmatprep.subr.bf16.mxu0 %v217
    %262 = vmatpush1.bf16.msra.mxu0 %v216
    %263 = vmatprep.subr.bf16.mxu0 %v220
    %264 = vmatpush1.bf16.msra.mxu0 %v219
    %265 = vmatprep.subr.bf16.mxu0 %v223
    %266 = vmatpush1.bf16.msra.mxu0 %v222
    %267 = vmatprep.subr.bf16.mxu0 %v226
    %268 = vmatpush1.bf16.msra.mxu0 %v225
    %269 = vmatprep.subr.bf16.mxu0 %v229
    %270 = vmatpush1.bf16.msra.mxu0 %v228
    %271 = vmatprep.subr.bf16.mxu0 0
    %272 = vmatpush1.bf16.msra.mxu0 0
    %273 = vmatprep.subr.bf16.mxu0 0
    %274 = vmatpush1.bf16.msra.mxu0 0
    %275 = vmatprep.subr.bf16.mxu0 0
    %276 = vmatpush1.bf16.msra.mxu0 0
    %277 = vmatprep.subr.bf16.mxu0 0
    %278 = vmatpush1.bf16.msra.mxu0 0
    %279 = vmatprep.subr.bf16.mxu0 0
    %280 = vmatpush1.bf16.msra.mxu0 0
    %281 = vmatprep.subr.bf16.mxu0 0
    %282 = vmatpush1.bf16.msra.mxu0 0
    %283 = vmatprep.subr.bf16.mxu0 0
    %284 = vmatpush1.bf16.msra.mxu0 0
    %285 = vmatprep.subr.bf16.mxu0 0
    %286 = vmatpush1.bf16.msra.mxu0 0
    %287 = vmatprep.mubr.bf16.mxu0 0
    %288 = vmatmul.mubr.bf16.gmra.mrb[0].mxu0 %v74
    %v289 = vpop.f32.mrb[0].mxu0
    %v290 = vadd.f32 %v115, %v289
    %v291 = vpop.f32.mrb[0].mxu0
    %v292 = vadd.f32 %v119, %v291
    %v293 = vpop.f32.mrb[0].mxu0
    %v294 = vadd.f32 %v115, %v293
    %v295 = vpop.f32.mrb[0].mxu0
    %v296 = vadd.f32 %v119, %v295
    %297 = vmatprep.mubr.bf16.mxu0 0
    %298 = vmatmul.mubr.bf16.gmra.mrb[0].mxu0 %v75
    %v299 = vpop.f32.mrb[0].mxu0
    %v300 = vadd.f32 %v115, %v299
    %v301 = vpop.f32.mrb[0].mxu0
    %v302 = vadd.f32 %v119, %v301
    %v303 = vpop.f32.mrb[0].mxu0
    %v304 = vadd.f32 %v115, %v303
    %v305 = vpop.f32.mrb[0].mxu0
    %v306 = vadd.f32 %v119, %v305
    %307 = vmatprep.mubr.bf16.mxu0 0
    %308 = vmatmul.mubr.bf16.gmra.mrb[0].mxu0 %v76
    %v309 = vpop.f32.mrb[0].mxu0
    %v310 = vadd.f32 %v115, %v309
    %v311 = vpop.f32.mrb[0].mxu0
    %v312 = vadd.f32 %v119, %v311
    %v313 = vpop.f32.mrb[0].mxu0
    %v314 = vadd.f32 %v115, %v313
    %v315 = vpop.f32.mrb[0].mxu0
    %v316 = vadd.f32 %v119, %v315
    %317 = vmatprep.mubr.bf16.mxu0 0
    %318 = vmatmul.mubr.bf16.gmra.mrb[0].mxu0 %v77
    %v319 = vpop.f32.mrb[0].mxu0
    %v320 = vadd.f32 %v115, %v319
    %v321 = vpop.f32.mrb[0].mxu0
    %v322 = vadd.f32 %v119, %v321
    %v323 = vpop.f32.mrb[0].mxu0
    %v324 = vadd.f32 %v115, %v323
    %v325 = vpop.f32.mrb[0].mxu0
    %v326 = vadd.f32 %v119, %v325
    %327 = vdwg.mxu0
    %328 = vmatprep.subr.bf16.mxu0 0
    %329 = vmatpush1.bf16.msra.mxu0 %v209
    %330 = vmatprep.subr.bf16.mxu0 0
    %331 = vmatpush1.bf16.msra.mxu0 %v212
    %332 = vmatprep.subr.bf16.mxu0 0
    %333 = vmatpush1.bf16.msra.mxu0 %v215
    %334 = vmatprep.subr.bf16.mxu0 0
    %335 = vmatpush1.bf16.msra.mxu0 %v218
    %336 = vmatprep.subr.bf16.mxu0 0
    %337 = vmatpush1.bf16.msra.mxu0 %v221
    %338 = vmatprep.subr.bf16.mxu0 0
    %339 = vmatpush1.bf16.msra.mxu0 %v224
    %340 = vmatprep.subr.bf16.mxu0 0
    %341 = vmatpush1.bf16.msra.mxu0 %v227
    %342 = vmatprep.subr.bf16.mxu0 0
    %343 = vmatpush1.bf16.msra.mxu0 %v230
    %344 = vmatprep.subr.bf16.mxu0 0
    %345 = vmatpush1.bf16.msra.mxu0 0
    %346 = vmatprep.subr.bf16.mxu0 0
    %347 = vmatpush1.bf16.msra.mxu0 0
    %348 = vmatprep.subr.bf16.mxu0 0
    %349 = vmatpush1.bf16.msra.mxu0 0
    %350 = vmatprep.subr.bf16.mxu0 0
    %351 = vmatpush1.bf16.msra.mxu0 0
    %352 = vmatprep.subr.bf16.mxu0 0
    %353 = vmatpush1.bf16.msra.mxu0 0
    %354 = vmatprep.subr.bf16.mxu0 0
    %355 = vmatpush1.bf16.msra.mxu0 0
    %356 = vmatprep.subr.bf16.mxu0 0
    %357 = vmatpush1.bf16.msra.mxu0 0
    %358 = vmatprep.subr.bf16.mxu0 0
    %359 = vmatpush1.bf16.msra.mxu0 0
    %360 = vmatprep.mubr.bf16.mxu0 0
    %361 = vmatmul.mubr.bf16.gmra.mrb[0].mxu0 %v74
    %v362 = vpop.f32.mrb[0].mxu0
    %v363 = vadd.f32 %v123, %v362
    %v364 = vpop.f32.mrb[0].mxu0
    %v365 = vpop.f32.mrb[0].mxu0
    %v366 = vadd.f32 %v123, %v365
    %v367 = vpop.f32.mrb[0].mxu0
    %368 = vmatprep.mubr.bf16.mxu0 0
    %369 = vmatmul.mubr.bf16.gmra.mrb[0].mxu0 %v75
    %v370 = vpop.f32.mrb[0].mxu0
    %v371 = vadd.f32 %v123, %v370
    %v372 = vpop.f32.mrb[0].mxu0
    %v373 = vpop.f32.mrb[0].mxu0
    %v374 = vadd.f32 %v123, %v373
    %v375 = vpop.f32.mrb[0].mxu0
    %376 = vmatprep.mubr.bf16.mxu0 0
    %377 = vmatmul.mubr.bf16.gmra.mrb[0].mxu0 %v76
    %v378 = vpop.f32.mrb[0].mxu0
    %v379 = vadd.f32 %v123, %v378
    %v380 = vpop.f32.mrb[0].mxu0
    %v381 = vpop.f32.mrb[0].mxu0
    %v382 = vadd.f32 %v123, %v381
    %v383 = vpop.f32.mrb[0].mxu0
    %384 = vmatprep.mubr.bf16.mxu0 0
    %385 = vmatmul.mubr.bf16.gmra.mrb[0].mxu0 %v77
    %v386 = vpop.f32.mrb[0].mxu0
    %v387 = vadd.f32 %v123, %v386
    %v388 = vpop.f32.mrb[0].mxu0
    %v389 = vpop.f32.mrb[0].mxu0
    %v390 = vadd.f32 %v123, %v389
    %v391 = vpop.f32.mrb[0].mxu0
    %392 = vdwg.mxu0
    %393 = vst [vmem:[#allocation2] sm:$0xff] %v290
    %394 = vst [vmem:[#allocation2 + $0x8] sm:$0xff] %v292
    %395 = vst [vmem:[#allocation2 + $0x10] sm:$0xff] %v363
    %396 = vst [vmem:[#allocation2 + $0x18] sm:$0xff] %v294
    %397 = vst [vmem:[#allocation2 + $0x20] sm:$0xff] %v296
    %398 = vst [vmem:[#allocation2 + $0x28] sm:$0xff] %v366
    %399 = vst [vmem:[#allocation2 + $0x30] sm:$0xff] %v300
    %400 = vst [vmem:[#allocation2 + $0x38] sm:$0xff] %v302
    %401 = vst [vmem:[#allocation2 + $0x40] sm:$0xff] %v371
    %402 = vst [vmem:[#allocation2 + $0x48] sm:$0xff] %v304
    %403 = vst [vmem:[#allocation2 + $0x50] sm:$0xff] %v306
    %404 = vst [vmem:[#allocation2 + $0x58] sm:$0xff] %v374
    %405 = vst [vmem:[#allocation2 + $0x60] sm:$0xff] %v310
    %406 = vst [vmem:[#allocation2 + $0x68] sm:$0xff] %v312
    %407 = vst [vmem:[#allocation2 + $0x70] sm:$0xff] %v379
    %408 = vst [vmem:[#allocation2 + $0x78] sm:$0xff] %v314
    %409 = vst [vmem:[#allocation2 + $0x80] sm:$0xff] %v316
    %410 = vst [vmem:[#allocation2 + $0x88] sm:$0xff] %v382
    %411 = vst [vmem:[#allocation2 + $0x90] sm:$0xff] %v320
    %412 = vst [vmem:[#allocation2 + $0x98] sm:$0xff] %v322
    %413 = vst [vmem:[#allocation2 + $0xa0] sm:$0xff] %v387
    %414 = vst [vmem:[#allocation2 + $0xa8] sm:$0xff] %v324
    %415 = vst [vmem:[#allocation2 + $0xb0] sm:$0xff] %v326
    %416 = vst [vmem:[#allocation2 + $0xb8] sm:$0xff] %v390
    %v417 = vld [vmem:[#allocation8] sm:$0xff]
    %v418 = vld [vmem:[#allocation8 + $0x8] sm:$0xf]
    %v419 = vld [vmem:[#allocation8 + $0xc] sm:$0xff]
    %v420 = vld [vmem:[#allocation8 + $0x14] sm:$0xf]
    %v421 = vld [vmem:[#allocation8 + $0x18] sm:$0xff]
    %v422 = vld [vmem:[#allocation8 + $0x20] sm:$0xf]
    %v423 = vld [vmem:[#allocation8 + $0x24] sm:$0xff]
    %v424 = vld [vmem:[#allocation8 + $0x2c] sm:$0xf]
    %v425 = vld [vmem:[#allocation8 + $0x30] sm:$0xff]
    %v426 = vld [vmem:[#allocation8 + $0x38] sm:$0xf]
    %v427 = vld [vmem:[#allocation8 + $0x3c] sm:$0xff]
    %v428 = vld [vmem:[#allocation8 + $0x44] sm:$0xf]
    %v429 = vld [vmem:[#allocation8 + $0x48] sm:$0xff]
    %v430 = vld [vmem:[#allocation8 + $0x50] sm:$0xf]
    %v431 = vld [vmem:[#allocation8 + $0x54] sm:$0xff]
    %v432 = vld [vmem:[#allocation8 + $0x5c] sm:$0xf]
    %v433 = vld [vmem:[#allocation8 + $0x60] sm:$0xff]
    %v434 = vld [vmem:[#allocation8 + $0x68] sm:$0xf]
    %v435 = vld [vmem:[#allocation8 + $0x6c] sm:$0xff]
    %v436 = vld [vmem:[#allocation8 + $0x74] sm:$0xf]
    %v437 = vld [vmem:[#allocation8 + $0x78] sm:$0xff]
    %v438 = vld [vmem:[#allocation8 + $0x80] sm:$0xf]
    %v439 = vld [vmem:[#allocation8 + $0x84] sm:$0xff]
    %v440 = vld [vmem:[#allocation8 + $0x8c] sm:$0xf]
    %v441 = vld [vmem:[#allocation8 + $0x90] sm:$0xff]
    %v442 = vld [vmem:[#allocation8 + $0x98] sm:$0xf]
    %v443 = vld [vmem:[#allocation8 + $0x9c] sm:$0xff]
    %v444 = vld [vmem:[#allocation8 + $0xa4] sm:$0xf]
    %v445 = vld [vmem:[#allocation8 + $0xa8] sm:$0xff]
    %v446 = vld [vmem:[#allocation8 + $0xb0] sm:$0xf]
    %v447 = vld [vmem:[#allocation8 + $0xb4] sm:$0xff]
    %v448 = vld [vmem:[#allocation8 + $0xbc] sm:$0xf]
    %v449 = vld [vmem:[%s4] sm:$0x7]
    loop: start=0, step=1, limit=8
    $region34: #{tpu_custom_call.1} parent=1 // loop_pre_header
      _
    $region35: #{tpu_custom_call.1} parent=1 // loop_header
      %s451 = sphi 0, %s455
      %p452 = scmp.ge.s32.totalorder %s451, 8
      %v456 = vphi 0.0, %v709
    $region36: #{tpu_custom_call.1} parent=1 // loop_header_branch
      %454 = sbr.rel (%p452) target = $region40
    $region37: #{tpu_custom_call.1} parent=1 // loop_body
      %s457 = smul.u32 %s451, 3
      %s458 = smul.addr %s457, 8
      %s459 = scalar_lea.vmem [#allocation2], %s458
      %v460 = vld [vmem:[%s459] sm:$0xff]
      %v461 = vld [vmem:[%s459 + $0x8] sm:$0xff]
      %v462 = vld [vmem:[%s459 + $0x10] sm:$0xff]
      %v463 = vpack.c.bf16 %v456, %v456
      %v465 = vlaneseq
      %v466 = vshrl.u32 %v465, 7
      %v467 = vsub.s32 0, %v466
      %v468 = vrot.slane %v449, %v467
      %v469 = vlaneseq
      %v470 = vshrl.u32 %v469, 7
      %v471 = vsub.s32 1, %v470
      %v472 = vrot.slane %v449, %v471
      %v473 = vlaneseq
      %v474 = vshrl.u32 %v473, 7
      %v475 = vsub.s32 2, %v474
      %v476 = vrot.slane %v449, %v475
      %v512 = vunpack.c.l.b16 %v417
      %v513 = vunpack.c.h.b16 %v417
      %v514 = vunpack.c.l.b16 %v418
      %v515 = vunpack.c.l.b16 %v419
      %v516 = vunpack.c.h.b16 %v419
      %v517 = vunpack.c.l.b16 %v420
      %v518 = vunpack.c.l.b16 %v421
      %v519 = vunpack.c.h.b16 %v421
      %v520 = vunpack.c.l.b16 %v422
      %v521 = vunpack.c.l.b16 %v423
      %v522 = vunpack.c.h.b16 %v423
      %v523 = vunpack.c.l.b16 %v424
      %v524 = vunpack.c.l.b16 %v425
      %v525 = vunpack.c.h.b16 %v425
      %v526 = vunpack.c.l.b16 %v426
      %v527 = vunpack.c.l.b16 %v427
      %v528 = vunpack.c.h.b16 %v427
      %v529 = vunpack.c.l.b16 %v428
      %v530 = vunpack.c.l.b16 %v429
      %v531 = vunpack.c.h.b16 %v429
      %v532 = vunpack.c.l.b16 %v430
      %v533 = vunpack.c.l.b16 %v431
      %v534 = vunpack.c.h.b16 %v431
      %v535 = vunpack.c.l.b16 %v432
      %v536 = vunpack.c.l.b16 %v433
      %v537 = vunpack.c.h.b16 %v433
      %v538 = vunpack.c.l.b16 %v434
      %v539 = vunpack.c.l.b16 %v435
      %v540 = vunpack.c.h.b16 %v435
      %v541 = vunpack.c.l.b16 %v436
      %v542 = vunpack.c.l.b16 %v437
      %v543 = vunpack.c.h.b16 %v437
      %v544 = vunpack.c.l.b16 %v438
      %v545 = vunpack.c.l.b16 %v439
      %v546 = vunpack.c.h.b16 %v439
      %v547 = vunpack.c.l.b16 %v440
      %v548 = vunpack.c.l.b16 %v441
      %v549 = vunpack.c.h.b16 %v441
      %v550 = vunpack.c.l.b16 %v442
      %v551 = vunpack.c.l.b16 %v443
      %v552 = vunpack.c.h.b16 %v443
      %v553 = vunpack.c.l.b16 %v444
      %v554 = vunpack.c.l.b16 %v445
      %v555 = vunpack.c.h.b16 %v445
      %v556 = vunpack.c.l.b16 %v446
      %v557 = vunpack.c.l.b16 %v447
      %v558 = vunpack.c.h.b16 %v447
      %v559 = vunpack.c.l.b16 %v448
      %v560 = vpack.c.b16 %v515, %v512
      %v561 = vpack.c.b16 %v516, %v513
      %v562 = vpack.c.b16 %v517, %v514
      %v563 = vpack.c.b16 %v521, %v518
      %v564 = vpack.c.b16 %v522, %v519
      %v565 = vpack.c.b16 %v523, %v520
      %v566 = vpack.c.b16 %v527, %v524
      %v567 = vpack.c.b16 %v528, %v525
      %v568 = vpack.c.b16 %v529, %v526
      %v569 = vpack.c.b16 %v533, %v530
      %v570 = vpack.c.b16 %v534, %v531
      %v571 = vpack.c.b16 %v535, %v532
      %v572 = vpack.c.b16 %v539, %v536
      %v573 = vpack.c.b16 %v540, %v537
      %v574 = vpack.c.b16 %v541, %v538
      %v575 = vpack.c.b16 %v545, %v542
      %v576 = vpack.c.b16 %v546, %v543
      %v577 = vpack.c.b16 %v547, %v544
      %v578 = vpack.c.b16 %v551, %v548
      %v579 = vpack.c.b16 %v552, %v549
      %v580 = vpack.c.b16 %v553, %v550
      %v581 = vpack.c.b16 %v557, %v554
      %v582 = vpack.c.b16 %v558, %v555
      %v583 = vpack.c.b16 %v559, %v556
      %608 = vmatprep.subr.bf16.mxu0 %v561
      %609 = vmatpush1.bf16.msra.mxu0 %v560
      %610 = vmatprep.subr.bf16.mxu0 %v564
      %611 = vmatpush1.bf16.msra.mxu0 %v563
      %612 = vmatprep.subr.bf16.mxu0 %v567
      %613 = vmatpush1.bf16.msra.mxu0 %v566
      %614 = vmatprep.subr.bf16.mxu0 %v570
      %615 = vmatpush1.bf16.msra.mxu0 %v569
      %616 = vmatprep.subr.bf16.mxu0 %v573
      %617 = vmatpush1.bf16.msra.mxu0 %v572
      %618 = vmatprep.subr.bf16.mxu0 %v576
      %619 = vmatpush1.bf16.msra.mxu0 %v575
      %620 = vmatprep.subr.bf16.mxu0 %v579
      %621 = vmatpush1.bf16.msra.mxu0 %v578
      %622 = vmatprep.subr.bf16.mxu0 %v582
      %623 = vmatpush1.bf16.msra.mxu0 %v581
      %624 = vmatprep.subr.bf16.mxu0 0
      %625 = vmatpush1.bf16.msra.mxu0 0
      %626 = vmatprep.subr.bf16.mxu0 0
      %627 = vmatpush1.bf16.msra.mxu0 0
      %628 = vmatprep.subr.bf16.mxu0 0
      %629 = vmatpush1.bf16.msra.mxu0 0
      %630 = vmatprep.subr.bf16.mxu0 0
      %631 = vmatpush1.bf16.msra.mxu0 0
      %632 = vmatprep.subr.bf16.mxu0 0
      %633 = vmatpush1.bf16.msra.mxu0 0
      %634 = vmatprep.subr.bf16.mxu0 0
      %635 = vmatpush1.bf16.msra.mxu0 0
      %636 = vmatprep.subr.bf16.mxu0 0
      %637 = vmatpush1.bf16.msra.mxu0 0
      %638 = vmatprep.subr.bf16.mxu0 0
      %639 = vmatpush1.bf16.msra.mxu0 0
      %640 = vmatprep.mubr.bf16.mxu0 0
      %641 = vmatmul.mubr.bf16.gmra.mrb[0].mxu0 %v463
      %v642 = vpop.f32.mrb[0].mxu0
      %v643 = vadd.f32 %v468, %v642
      %v644 = vpop.f32.mrb[0].mxu0
      %v645 = vadd.f32 %v472, %v644
      %v646 = vpop.f32.mrb[0].mxu0
      %v647 = vpop.f32.mrb[0].mxu0
      %648 = vdwg.mxu0
      %649 = vmatprep.subr.bf16.mxu0 0
      %650 = vmatpush1.bf16.msra.mxu0 %v562
      %651 = vmatprep.subr.bf16.mxu0 0
      %652 = vmatpush1.bf16.msra.mxu0 %v565
      %653 = vmatprep.subr.bf16.mxu0 0
      %654 = vmatpush1.bf16.msra.mxu0 %v568
      %655 = vmatprep.subr.bf16.mxu0 0
      %656 = vmatpush1.bf16.msra.mxu0 %v571
      %657 = vmatprep.subr.bf16.mxu0 0
      %658 = vmatpush1.bf16.msra.mxu0 %v574
      %659 = vmatprep.subr.bf16.mxu0 0
      %660 = vmatpush1.bf16.msra.mxu0 %v577
      %661 = vmatprep.subr.bf16.mxu0 0
      %662 = vmatpush1.bf16.msra.mxu0 %v580
      %663 = vmatprep.subr.bf16.mxu0 0
      %664 = vmatpush1.bf16.msra.mxu0 %v583
      %665 = vmatprep.subr.bf16.mxu0 0
      %666 = vmatpush1.bf16.msra.mxu0 0
      %667 = vmatprep.subr.bf16.mxu0 0
      %668 = vmatpush1.bf16.msra.mxu0 0
      %669 = vmatprep.subr.bf16.mxu0 0
      %670 = vmatpush1.bf16.msra.mxu0 0
      %671 = vmatprep.subr.bf16.mxu0 0
      %672 = vmatpush1.bf16.msra.mxu0 0
      %673 = vmatprep.subr.bf16.mxu0 0
      %674 = vmatpush1.bf16.msra.mxu0 0
      %675 = vmatprep.subr.bf16.mxu0 0
      %676 = vmatpush1.bf16.msra.mxu0 0
      %677 = vmatprep.subr.bf16.mxu0 0
      %678 = vmatpush1.bf16.msra.mxu0 0
      %679 = vmatprep.subr.bf16.mxu0 0
      %680 = vmatpush1.bf16.msra.mxu0 0
      %681 = vmatprep.mubr.bf16.mxu0 0
      %682 = vmatmul.mubr.bf16.gmra.mrb[0].mxu0 %v463
      %v683 = vpop.f32.mrb[0].mxu0
      %v684 = vadd.f32 %v476, %v683
      %v685 = vpop.f32.mrb[0].mxu0
      %v686 = vpop.f32.mrb[0].mxu0
      %v687 = vpop.f32.mrb[0].mxu0
      %688 = vdwg.mxu0
      %v689 = vadd.f32 %v460, %v643
      %v690 = vxor.u32 %v689, 2147483648
      %v691 = vmul.f32 %v690, 1.442695
      %v692 = vpow.pop %v691
      %v693 = vadd.f32 %v692, 1.0
      %v694 = vrcp.pop %v693
      %v695 = vmul.f32 1.0, %v694
      %v696 = vadd.f32 %v461, %v645
      %v697 = vxor.u32 %v696, 2147483648
      %v698 = vmul.f32 %v697, 1.442695
      %v699 = vpow.pop %v698
      %v700 = vadd.f32 %v699, 1.0
      %v701 = vrcp.pop %v700
      %v702 = vmul.f32 1.0, %v701
      %v703 = vmul.f32 %v695, %v684
      %v704 = vadd.f32 %v462, %v703
      %v705 = vtanh.pop %v704
      %v706 = vsub.f32 1.0, %v702
      %v707 = vmul.f32 %v706, %v705
      %v708 = vmul.f32 %v702, %v456
      %v709 = vadd.f32 %v707, %v708
      %s710 = smul.u32 %s451, 8
      %s711 = scalar_lea.vmem [#allocation9], %s710
      %712 = vst [vmem:[%s711] sm:$0xff] %v709
    $region38: #{tpu_custom_call.1} parent=1 // loop_footer
      %s455 = sadd.s32 1, %s451
    $region39: #{tpu_custom_call.1} parent=1 // loop_footer_branch
      %450 = sbr.rel target = $region35
    $region40: #{tpu_custom_call.1} parent=1 // loop_exit
      _
    %713 = vst [vmem:[#allocation10] sm:$0xff] %v456
    // Predicated region
    $region41: #{tpu_custom_call.1} parent=1 // pred_check
      _
    $region42: #{tpu_custom_call.1} parent=1 // pred_check_branch
      %715 = sbr.rel (0) target = $region44
    $region43: #{tpu_custom_call.1} parent=1 // pred_region
      %s717 = ssub.s32 1024, 1024
      %718 = vsyncadd [#allocation5], %s717
      %s719 = sshll.u32 [#allocation9], 4
      %s720 = int_to_ptr.vmem [resolvable:$true] %s719
      %725 = dma.vmem_to_hbm [thread:$0]  %s720, 1024, %s5, [#allocation5], 128, 128, 8
    $region44: #{tpu_custom_call.1} parent=1 // pred_fallthru
      _
    // Predicated region
    $region45: #{tpu_custom_call.1} parent=1 // pred_check
      _
    $region46: #{tpu_custom_call.1} parent=1 // pred_check_branch
      %727 = sbr.rel (0) target = $region48
    $region47: #{tpu_custom_call.1} parent=1 // pred_region
      %s729 = ssub.s32 128, 128
      %730 = vsyncadd [#allocation11], %s729
      %s732 = sshll.u32 [#allocation10], 4
      %s733 = int_to_ptr.vmem [resolvable:$true] %s732
      %735 = dma.vmem_to_hbm [thread:$0]  %s733, 128, %s6, [#allocation11]
    $region48: #{tpu_custom_call.1} parent=1 // pred_fallthru
      _
    // Predicated region
    $region49: #{tpu_custom_call.1} parent=1 // pred_check
      _
    $region50: #{tpu_custom_call.1} parent=1 // pred_check_branch
      %737 = sbr.rel (0) target = $region52
    $region51: #{tpu_custom_call.1} parent=1 // pred_region
      %738 = dma.done [#allocation5], 1024
    $region52: #{tpu_custom_call.1} parent=1 // pred_fallthru
      _
    // Predicated region
    $region53: #{tpu_custom_call.1} parent=1 // pred_check
      _
    $region54: #{tpu_custom_call.1} parent=1 // pred_check_branch
      %740 = sbr.rel (0) target = $region56
    $region55: #{tpu_custom_call.1} parent=1 // pred_region
      %741 = dma.done [#allocation11], 128
    $region56: #{tpu_custom_call.1} parent=1 // pred_fallthru
      _
    %742 = vsyncpa [#allocation4], 1
    %743 = vsyncpa [#allocation7], 1
    %744 = vsyncpa [#allocation5], 1
    %745 = vsyncpa [#allocation11], 1

</llo_original>
